<compile_context>
chip_gen: v7x
topology: tpu7x:2x2x1
jax: 0.10.0
libtpu: 0.0.40
codegen_flags: <defaults>
</compile_context>

<pallas_src>
import functools

import jax
import jax.numpy as jnp
from jax import lax
from jax.experimental import pallas as pl
from jax.experimental.pallas import tpu as pltpu


def _round_up(x, m):
    return ((x + m - 1) // m) * m


def _fused_res1d_kernel(x_ref, wstem_ref, w1s_ref, w2s_ref, o_ref,
                        *, lt, halo, l_orig, nblock):
    """x_ref: (1, Lpad) padded input row (resident per batch element).
    wstem_ref: (C, 3) f32; w1s_ref: (nB, Cmid, C) bf16;
    w2s_ref: (nB, C, 3*Cmid) bf16 (tap-major im2col); o_ref: (C, Lt)."""
    t = pl.program_id(1)
    w = lt + 2 * halo

    # Aligned overlapping window (halo on both sides) of the zero-padded input.
    start = pl.multiple_of(t * lt, 128)
    x = x_ref[:, pl.ds(start, w)].astype(jnp.float32)              # (1, W)

    # Global-position validity mask: zero everything outside the true sequence
    # [0, L) after every layer, so the tiled computation reproduces the zero
    # 'same' padding of the untiled network at the real boundaries.
    pos = lax.broadcasted_iota(jnp.int32, (1, w), 1)
    lo = halo - t * lt
    hi = l_orig + halo - t * lt
    gmask = (pos >= lo) & (pos < hi)

    # ---- stem: Conv1d(1, C, k=3, pad=1, bias=False) + ReLU (VPU broadcasts) --
    wstem = wstem_ref[...].astype(jnp.float32)                     # (C, 3)
    x_lft = pltpu.roll(x, shift=1, axis=1)                         # x[t-1]
    x_rgt = pltpu.roll(x, shift=w - 1, axis=1)                     # x[t+1]
    z = wstem[:, 0:1] * x_lft + wstem[:, 1:2] * x + wstem[:, 2:3] * x_rgt
    z = jnp.where(gmask, jnp.maximum(z, 0.0), 0.0)                 # (C, W) f32

    # ---- nBlock residual blocks ---------------------------------------------
    def block(i, z):
        w1 = w1s_ref[i]                                            # (Cmid, C) bf16
        w2 = w2s_ref[i]                                            # (C, 3*Cmid) bf16
        # layer1: 1x1 conv + ReLU == channel matmul (bf16 operands, f32 acc).
        h = jnp.maximum(
            jnp.dot(w1, z.astype(jnp.bfloat16),
                    preferred_element_type=jnp.float32), 0.0)      # (Cmid, W)
        # layer2: K=3 conv as ONE im2col matmul; taps via XLU rolls (no
        # odd-width pad/concat slices).
        taps = jnp.concatenate(
            [pltpu.roll(h, shift=1, axis=1),                       # h[t-1]
             h,
             pltpu.roll(h, shift=w - 1, axis=1)], axis=0)          # h[t+1]
        conv = jnp.dot(w2, taps.astype(jnp.bfloat16),
                       preferred_element_type=jnp.float32)         # (C, W)
        # fused ReLU + residual add, then re-apply the boundary mask.
        z = jnp.maximum(conv, 0.0) + z
        return jnp.where(gmask, z, 0.0)

    if nblock <= 8:
        for i in range(nblock):
            z = block(i, z)
    else:
        z = lax.fori_loop(0, nblock, block, z)

    # Store only the central Lt lanes: aligned, lane-dense store.
    o_ref[...] = z[:, halo:halo + lt].astype(o_ref.dtype)


def _pick_tile(c, cmid, l):
    """Largest L tile (multiple of 128, <= 2048) fitting a ~12 MiB budget."""
    per_lane = 4 * (3 * c) + 4 * (3 * cmid) + 2 * (3 * cmid) + 2 * 4 * c
    lt = (12 * 2**20 // per_lane) // 128 * 128
    lt = int(max(128, min(lt, 2048)))
    return min(lt, _round_up(max(l, 1), 128))


def res1d_pallas(x_ncl, wstem_ck, w1s, w2s, *, lt=None):
    """x_ncl: (B, 1, L); wstem_ck: (C, 3); w1s: (nB, Cmid, C);
    w2s: (nB, C, 3*Cmid) tap-major im2col. Returns (B, C, L) (NCL layout)."""
    B, cin, L = x_ncl.shape
    assert cin == 1, "stem expects a single input channel"
    C, K = wstem_ck.shape
    assert K == 3, "fused kernel assumes K=3 'same' padding"
    nblock, cmid, c_chk = w1s.shape
    assert c_chk == C and w2s.shape == (nblock, C, 3 * cmid) and nblock >= 1

    halo = _round_up(nblock + 1, 128)        # >= receptive-field growth/side
    if lt is None:
        lt = _pick_tile(C, cmid, L)
    assert lt % 128 == 0
    n_lt = pl.cdiv(L, lt)
    l_store = n_lt * lt
    l_pad = l_store + 2 * halo
    w = lt + 2 * halo

    # Zero-pad the single-channel input once (halo left, halo + round-up right).
    xp = jnp.pad(x_ncl.astype(jnp.float32),
                 ((0, 0), (0, 0), (halo, l_pad - L - halo)))
    # Pre-cast weights to the MXU dtype once (hoisted out of every grid step).
    wstem_f = wstem_ck.astype(jnp.float32)
    w1s_bf = w1s.astype(jnp.bfloat16)
    w2s_bf = w2s.astype(jnp.bfloat16)

    # Rough per-step VMEM need: intermediates + double-buffered IO + weights.
    est = ((4 * (3 * C) + 4 * (3 * cmid) + 2 * (3 * cmid)) * w
           + 2 * 4 * l_pad + 2 * 4 * C * lt
           + 2 * 2 * nblock * (cmid * C + 3 * cmid * C))
    vmem_limit = int(min(48 * 2**20, max(32 * 2**20, 2 * est)))

    flops = 2 * B * l_store * (3 * C + nblock * (C * cmid + 3 * C * cmid))
    bytes_acc = (4 * B * (l_pad + C * l_store)
                 + 2 * nblock * 4 * C * cmid + 4 * C * 3)
    cost = pl.CostEstimate(flops=int(flops), transcendentals=0,
                           bytes_accessed=int(bytes_acc))

    kernel = functools.partial(_fused_res1d_kernel, lt=lt, halo=halo,
                               l_orig=L, nblock=nblock)
    out = pl.pallas_call(
        kernel,
        out_shape=jax.ShapeDtypeStruct((B, C, l_store), x_ncl.dtype),
        grid=(B, n_lt),
        in_specs=[
            pl.BlockSpec((None, 1, l_pad), lambda b, t: (b, 0, 0)),      # x row
            pl.BlockSpec((C, 3), lambda b, t: (0, 0)),                   # stem w
            pl.BlockSpec((nblock, cmid, C), lambda b, t: (0, 0, 0)),     # all w1
            pl.BlockSpec((nblock, C, 3 * cmid), lambda b, t: (0, 0, 0)),  # all w2
        ],
        out_specs=pl.BlockSpec((None, C, lt), lambda b, t: (b, 0, t)),
        compiler_params=pltpu.CompilerParams(
            dimension_semantics=("parallel", "parallel"),
            vmem_limit_bytes=vmem_limit),
        cost_estimate=cost,
    )(xp, wstem_f, w1s_bf, w2s_bf)
    return out[:, :, :L]


@functools.partial(jax.jit, static_argnames=("is_linear", "lt"))
def res1d_forward(x_ncl, wstem_ck, w1s, w2s, is_linear, lt=None):
    """Matches Res1D.forward (x in PyTorch NCL convention: (B, 1, L))."""
    z = res1d_pallas(x_ncl, wstem_ck, w1s, w2s, lt=lt)   # (B, iSize, L)
    if is_linear:
        z = z.reshape(z.shape[0], -1)                    # z.view((batchSize, -1))
    return z


# -------- pure-JAX reference (lax.conv, same bf16-operand rounding) ----------
def _ref_conv1d(x_ncl, w_oik, pad):
    return lax.conv_general_dilated(
        x_ncl, w_oik, window_strides=(1,), padding=[(pad, pad)],
        dimension_numbers=("NCH", "OIH", "NCH"),
        preferred_element_type=jnp.float32)


def ref_forward(x_ncl, stem_torch, blocks_torch, is_linear):
    z = jnp.maximum(_ref_conv1d(x_ncl.astype(jnp.float32), stem_torch, 1), 0.0)
    for w1_t, w2_t in blocks_torch:
        h = jnp.maximum(_ref_conv1d(z.astype(jnp.bfloat16),
                                    w1_t.astype(jnp.bfloat16), 0), 0.0)
        o = jnp.maximum(_ref_conv1d(h.astype(jnp.bfloat16),
                                    w2_t.astype(jnp.bfloat16), 1), 0.0)
        z = o + z
    if is_linear:
        z = z.reshape(z.shape[0], -1)
    return z


def _uniform(key, shape, fan_in):
    bound = 1.0 / jnp.sqrt(jnp.float32(fan_in))
    return jax.random.uniform(key, shape, jnp.float32, -bound, bound)


def _make_params(key, i_size, n_block):
    mid = i_size // 2
    keys = jax.random.split(key, 1 + 2 * n_block)
    stem_torch = _uniform(keys[0], (i_size, 1, 3), 1 * 3)
    blocks_torch = []
    for i in range(n_block):
        w1_t = _uniform(keys[1 + 2 * i], (mid, i_size, 1), i_size * 1)
        w2_t = _uniform(keys[2 + 2 * i], (i_size, mid, 3), mid * 3)
        blocks_torch.append((w1_t, w2_t))
    # Kernel layouts: stem (C,3); w1 (Cmid,C); w2 im2col (C, 3*Cmid) tap-major.
    wstem_ck = stem_torch[:, 0, :]
    w1s = jnp.stack([w1[:, :, 0] for w1, _ in blocks_torch], axis=0)
    w2s = jnp.stack([jnp.transpose(w2, (0, 2, 1)).reshape(i_size, 3 * mid)
                     for _, w2 in blocks_torch], axis=0)
    return stem_torch, blocks_torch, wstem_ck, w1s, w2s


if __name__ == "__main__":
    key = jax.random.PRNGKey(0)
    # Case 1: module defaults at small shapes (single L tile, unrolled blocks).
    # Case 2: forces the multi-tile halo path and the fori_loop block path.
    cases = [
        dict(i_size=32, n_block=2, is_linear=False, B=2, L=16, lt=None),
        dict(i_size=32, n_block=10, is_linear=True, B=2, L=300, lt=128),
    ]
    for idx, cfg in enumerate(cases):
        kp, kx, key = jax.random.split(key, 3)
        stem_t, blocks_t, wstem_ck, w1s, w2s = _make_params(
            kp, cfg["i_size"], cfg["n_block"])
        x = jax.random.normal(kx, (cfg["B"], 1, cfg["L"]), jnp.float32)

        out = res1d_forward(x, wstem_ck, w1s, w2s, cfg["is_linear"], lt=cfg["lt"])
        out = jax.block_until_ready(out)

        ref = ref_forward(x, stem_t, blocks_t, cfg["is_linear"])
        assert out.shape == ref.shape, (idx, out.shape, ref.shape)
        err = float(jnp.max(jnp.abs(out - ref)))
        assert err < 1e-3, (idx, err)

    print("KERNEL_OK")
</pallas_src>

<mosaic_0001>
module attributes {stable_mosaic.version = 11 : i64} {
  func.func @_fused_res1d_kernel(%arg0: i32, %arg1: i32, %arg2: memref<1x1x384xf32, #tpu.memory_space<vmem>>, %arg3: memref<32x3xf32, #tpu.memory_space<vmem>>, %arg4: memref<2x16x32xbf16, #tpu.memory_space<vmem>>, %arg5: memref<2x32x48xbf16, #tpu.memory_space<vmem>>, %arg6: memref<1x32x128xf32, #tpu.memory_space<vmem>>) attributes {dimension_semantics = [#tpu.dimension_semantics<parallel>, #tpu.dimension_semantics<parallel>], iteration_bounds = array<i64: 2, 1>, scalar_prefetch = 0 : i64, scratch_operands = 0 : i64, tpu.core_type = #tpu.core_type<tc>, window_params = [{transform_indices = @transform_0, window_bounds = array<i64: 1, 1, 384>}, {pipeline_mode = #tpu.pipeline_mode<synchronous>, transform_indices = @transform_1, window_bounds = array<i64: 32, 3>}, {pipeline_mode = #tpu.pipeline_mode<synchronous>, transform_indices = @transform_2, window_bounds = array<i64: 2, 16, 32>}, {pipeline_mode = #tpu.pipeline_mode<synchronous>, transform_indices = @transform_3, window_bounds = array<i64: 2, 32, 48>}, {transform_indices = @transform_4, window_bounds = array<i64: 1, 32, 128>}]} {
    %c128_i32 = arith.constant 128 : i32
    %0 = arith.muli %arg1, %c128_i32 : i32
    %1 = tpu.assume_multiple %0, 128 : i32
    %c0 = arith.constant 0 : index
    %c0_0 = arith.constant 0 : index
    %2 = arith.index_cast %1 : i32 to index
    %3 = vector.load %arg2[%c0, %c0_0, %2] : memref<1x1x384xf32, #tpu.memory_space<vmem>>, vector<1x1x384xf32>
    %4 = vector.shape_cast %3 : vector<1x1x384xf32> to vector<1x384xf32>
    %5 = tpu.iota {dimensions = array<i32: 1>} : vector<1x384xi32>
    %c128_i32_1 = arith.constant 128 : i32
    %6 = arith.muli %arg1, %c128_i32_1 : i32
    %c128_i32_2 = arith.constant 128 : i32
    %7 = arith.subi %c128_i32_2, %6 : i32
    %c128_i32_3 = arith.constant 128 : i32
    %8 = arith.muli %arg1, %c128_i32_3 : i32
    %c144_i32 = arith.constant 144 : i32
    %9 = arith.subi %c144_i32, %8 : i32
    %10 = vector.broadcast %7 : i32 to vector<1x384xi32>
    %11 = arith.cmpi sge, %5, %10 : vector<1x384xi32>
    %12 = vector.broadcast %9 : i32 to vector<1x384xi32>
    %13 = arith.cmpi slt, %5, %12 : vector<1x384xi32>
    %14 = arith.andi %11, %13 : vector<1x384xi1>
    %c0_4 = arith.constant 0 : index
    %c0_5 = arith.constant 0 : index
    %15 = vector.load %arg3[%c0_4, %c0_5] : memref<32x3xf32, #tpu.memory_space<vmem>>, vector<32x3xf32>
    %c1_i32 = arith.constant 1 : i32
    %16 = tpu.dynamic_rotate %4 by %c1_i32 dim 1 : vector<1x384xf32>, i32 -> vector<1x384xf32>
    %c383_i32 = arith.constant 383 : i32
    %17 = tpu.dynamic_rotate %4 by %c383_i32 dim 1 : vector<1x384xf32>, i32 -> vector<1x384xf32>
    %18 = vector.extract_strided_slice %15 {offsets = [0, 0], sizes = [32, 1], strides = [1, 1]} : vector<32x3xf32> to vector<32x1xf32>
    %19 = vector.broadcast %18 : vector<32x1xf32> to vector<32x384xf32>
    %20 = vector.broadcast %16 : vector<1x384xf32> to vector<32x384xf32>
    %21 = arith.mulf %19, %20 : vector<32x384xf32>
    %22 = vector.extract_strided_slice %15 {offsets = [0, 1], sizes = [32, 1], strides = [1, 1]} : vector<32x3xf32> to vector<32x1xf32>
    %23 = vector.broadcast %22 : vector<32x1xf32> to vector<32x384xf32>
    %24 = vector.broadcast %4 : vector<1x384xf32> to vector<32x384xf32>
    %25 = arith.mulf %23, %24 : vector<32x384xf32>
    %26 = arith.addf %21, %25 : vector<32x384xf32>
    %27 = vector.extract_strided_slice %15 {offsets = [0, 2], sizes = [32, 1], strides = [1, 1]} : vector<32x3xf32> to vector<32x1xf32>
    %28 = vector.broadcast %27 : vector<32x1xf32> to vector<32x384xf32>
    %29 = vector.broadcast %17 : vector<1x384xf32> to vector<32x384xf32>
    %30 = arith.mulf %28, %29 : vector<32x384xf32>
    %31 = arith.addf %26, %30 : vector<32x384xf32>
    %cst = arith.constant 0.000000e+00 : f32
    %32 = vector.broadcast %cst : f32 to vector<32x384xf32>
    %33 = arith.maximumf %31, %32 : vector<32x384xf32>
    %cst_6 = arith.constant 0.000000e+00 : f32
    %34 = vector.shape_cast %14 : vector<1x384xi1> to vector<1x384xi1>
    %35 = vector.broadcast %34 : vector<1x384xi1> to vector<32x384xi1>
    %36 = vector.broadcast %cst_6 : f32 to vector<32x384xf32>
    %37 = arith.select %35, %33, %36 : vector<32x384xi1>, vector<32x384xf32>
    %c0_7 = arith.constant 0 : index
    %c0_8 = arith.constant 0 : index
    %c0_9 = arith.constant 0 : index
    %38 = vector.load %arg4[%c0_7, %c0_8, %c0_9] : memref<2x16x32xbf16, #tpu.memory_space<vmem>>, vector<1x16x32xbf16>
    %39 = vector.shape_cast %38 : vector<1x16x32xbf16> to vector<16x32xbf16>
    %c0_10 = arith.constant 0 : index
    %c0_11 = arith.constant 0 : index
    %c0_12 = arith.constant 0 : index
    %40 = vector.load %arg5[%c0_10, %c0_11, %c0_12] : memref<2x32x48xbf16, #tpu.memory_space<vmem>>, vector<1x32x48xbf16>
    %41 = vector.shape_cast %40 : vector<1x32x48xbf16> to vector<32x48xbf16>
    %42 = arith.truncf %37 : vector<32x384xf32> to vector<32x384xbf16>
    %cst_13 = arith.constant dense<0.000000e+00> : vector<16x384xf32>
    %43 = tpu.matmul %39, %42, %cst_13 {dimension_numbers = #tpu.dot_dimension_numbers<[1], [0], [0], [1], [0, 0, 1, 1], [], []>} : vector<16x32xbf16>, vector<32x384xbf16>, vector<16x384xf32> -> vector<16x384xf32>
    %cst_14 = arith.constant 0.000000e+00 : f32
    %44 = vector.broadcast %cst_14 : f32 to vector<16x384xf32>
    %45 = arith.maximumf %43, %44 : vector<16x384xf32>
    %c1_i32_15 = arith.constant 1 : i32
    %46 = tpu.dynamic_rotate %45 by %c1_i32_15 dim 1 : vector<16x384xf32>, i32 -> vector<16x384xf32>
    %c383_i32_16 = arith.constant 383 : i32
    %47 = tpu.dynamic_rotate %45 by %c383_i32_16 dim 1 : vector<16x384xf32>, i32 -> vector<16x384xf32>
    %48 = tpu.concatenate %46, %45, %47 in 0 : vector<16x384xf32>, vector<16x384xf32>, vector<16x384xf32> -> vector<48x384xf32>
    %49 = arith.truncf %48 : vector<48x384xf32> to vector<48x384xbf16>
    %cst_17 = arith.constant dense<0.000000e+00> : vector<32x384xf32>
    %50 = tpu.matmul %41, %49, %cst_17 {dimension_numbers = #tpu.dot_dimension_numbers<[1], [0], [0], [1], [0, 0, 1, 1], [], []>} : vector<32x48xbf16>, vector<48x384xbf16>, vector<32x384xf32> -> vector<32x384xf32>
    %cst_18 = arith.constant 0.000000e+00 : f32
    %51 = vector.broadcast %cst_18 : f32 to vector<32x384xf32>
    %52 = arith.maximumf %50, %51 : vector<32x384xf32>
    %53 = arith.addf %52, %37 : vector<32x384xf32>
    %cst_19 = arith.constant 0.000000e+00 : f32
    %54 = vector.shape_cast %14 : vector<1x384xi1> to vector<1x384xi1>
    %55 = vector.broadcast %54 : vector<1x384xi1> to vector<32x384xi1>
    %56 = vector.broadcast %cst_19 : f32 to vector<32x384xf32>
    %57 = arith.select %55, %53, %56 : vector<32x384xi1>, vector<32x384xf32>
    %c1 = arith.constant 1 : index
    %c0_20 = arith.constant 0 : index
    %c0_21 = arith.constant 0 : index
    %58 = vector.load %arg4[%c1, %c0_20, %c0_21] : memref<2x16x32xbf16, #tpu.memory_space<vmem>>, vector<1x16x32xbf16>
    %59 = vector.shape_cast %58 : vector<1x16x32xbf16> to vector<16x32xbf16>
    %c1_22 = arith.constant 1 : index
    %c0_23 = arith.constant 0 : index
    %c0_24 = arith.constant 0 : index
    %60 = vector.load %arg5[%c1_22, %c0_23, %c0_24] : memref<2x32x48xbf16, #tpu.memory_space<vmem>>, vector<1x32x48xbf16>
    %61 = vector.shape_cast %60 : vector<1x32x48xbf16> to vector<32x48xbf16>
    %62 = arith.truncf %57 : vector<32x384xf32> to vector<32x384xbf16>
    %cst_25 = arith.constant dense<0.000000e+00> : vector<16x384xf32>
    %63 = tpu.matmul %59, %62, %cst_25 {dimension_numbers = #tpu.dot_dimension_numbers<[1], [0], [0], [1], [0, 0, 1, 1], [], []>} : vector<16x32xbf16>, vector<32x384xbf16>, vector<16x384xf32> -> vector<16x384xf32>
    %cst_26 = arith.constant 0.000000e+00 : f32
    %64 = vector.broadcast %cst_26 : f32 to vector<16x384xf32>
    %65 = arith.maximumf %63, %64 : vector<16x384xf32>
    %c1_i32_27 = arith.constant 1 : i32
    %66 = tpu.dynamic_rotate %65 by %c1_i32_27 dim 1 : vector<16x384xf32>, i32 -> vector<16x384xf32>
    %c383_i32_28 = arith.constant 383 : i32
    %67 = tpu.dynamic_rotate %65 by %c383_i32_28 dim 1 : vector<16x384xf32>, i32 -> vector<16x384xf32>
    %68 = tpu.concatenate %66, %65, %67 in 0 : vector<16x384xf32>, vector<16x384xf32>, vector<16x384xf32> -> vector<48x384xf32>
    %69 = arith.truncf %68 : vector<48x384xf32> to vector<48x384xbf16>
    %cst_29 = arith.constant dense<0.000000e+00> : vector<32x384xf32>
    %70 = tpu.matmul %61, %69, %cst_29 {dimension_numbers = #tpu.dot_dimension_numbers<[1], [0], [0], [1], [0, 0, 1, 1], [], []>} : vector<32x48xbf16>, vector<48x384xbf16>, vector<32x384xf32> -> vector<32x384xf32>
    %cst_30 = arith.constant 0.000000e+00 : f32
    %71 = vector.broadcast %cst_30 : f32 to vector<32x384xf32>
    %72 = arith.maximumf %70, %71 : vector<32x384xf32>
    %73 = arith.addf %72, %57 : vector<32x384xf32>
    %cst_31 = arith.constant 0.000000e+00 : f32
    %74 = vector.shape_cast %14 : vector<1x384xi1> to vector<1x384xi1>
    %75 = vector.broadcast %74 : vector<1x384xi1> to vector<32x384xi1>
    %76 = vector.broadcast %cst_31 : f32 to vector<32x384xf32>
    %77 = arith.select %75, %73, %76 : vector<32x384xi1>, vector<32x384xf32>
    %78 = vector.extract_strided_slice %77 {offsets = [0, 128], sizes = [32, 128], strides = [1, 1]} : vector<32x384xf32> to vector<32x128xf32>
    %c0_32 = arith.constant 0 : index
    %c0_33 = arith.constant 0 : index
    %c0_34 = arith.constant 0 : index
    %79 = vector.load %arg6[%c0_32, %c0_33, %c0_34] : memref<1x32x128xf32, #tpu.memory_space<vmem>>, vector<1x32x128xf32>
    %80 = vector.shape_cast %79 : vector<1x32x128xf32> to vector<32x128xf32>
    %81 = vector.shape_cast %78 : vector<32x128xf32> to vector<1x32x128xf32>
    tpu.vector_store %arg6[%c0_32, %c0_33, %c0_34], %81 {strides = array<i32>} : memref<1x32x128xf32, #tpu.memory_space<vmem>>, vector<1x32x128xf32>,
    return
  }
  func.func @transform_0(%arg0: i32, %arg1: i32) -> (i32, i32, i32) {
    %c0_i32 = arith.constant 0 : i32
    %c0_i32_0 = arith.constant 0 : i32
    %c0_i32_1 = arith.constant 0 : i32
    return %arg0, %c0_i32, %c0_i32_0 : i32, i32, i32
  }
  func.func @transform_1(%arg0: i32, %arg1: i32) -> (i32, i32) {
    %c0_i32 = arith.constant 0 : i32
    %c0_i32_0 = arith.constant 0 : i32
    %c0_i32_1 = arith.constant 0 : i32
    return %c0_i32, %c0_i32_0 : i32, i32
  }
  func.func @transform_2(%arg0: i32, %arg1: i32) -> (i32, i32, i32) {
    %c0_i32 = arith.constant 0 : i32
    %c0_i32_0 = arith.constant 0 : i32
    %c0_i32_1 = arith.constant 0 : i32
    %c0_i32_2 = arith.constant 0 : i32
    return %c0_i32, %c0_i32_0, %c0_i32_1 : i32, i32, i32
  }
  func.func @transform_3(%arg0: i32, %arg1: i32) -> (i32, i32, i32) {
    %c0_i32 = arith.constant 0 : i32
    %c0_i32_0 = arith.constant 0 : i32
    %c0_i32_1 = arith.constant 0 : i32
    %c0_i32_2 = arith.constant 0 : i32
    return %c0_i32, %c0_i32_0, %c0_i32_1 : i32, i32, i32
  }
  func.func @transform_4(%arg0: i32, %arg1: i32) -> (i32, i32, i32) {
    %c0_i32 = arith.constant 0 : i32
    %c0_i32_0 = arith.constant 0 : i32
    return %arg0, %c0_i32, %arg1 : i32, i32, i32
  }
}

</mosaic_0001>

<llo_original>
// kernel: res1d_forward.1
$region0: #{res1d_forward.1}
  #allocation0 [shape = 'u32[]', space=smem, size = 0x4, offset = 0x4, fixed_abs, tag = 'smem constant byte address 0x4 - core index']
  #allocation1 [shape = 'u32[144,128]{1,0:T(1,128)}', space=vmem, size = 0x12000, scoped, tag = 'internal scratch']
  %s0 = inlined_call_operand.vmem [shape: f32[2,1,384], index: 0, kind: input, shape index: {}]
  %s1 = inlined_call_operand.vmem [shape: f32[32,3], index: 1, kind: input, shape index: {}]
  %s2 = inlined_call_operand.vmem [shape: bf16[2,16,32], index: 2, kind: input, shape index: {}]
  %s3 = inlined_call_operand.vmem [shape: bf16[2,32,48], index: 3, kind: input, shape index: {}]
  %s4 = inlined_call_operand.vmem [shape: f32[2,32,128], index: 4, kind: output, shape index: {}]
  %s5 = sld [smem:[#allocation0]]
  $region49: #{res1d_forward.1} parent=0
    _
  %s7 = ssub.s32 1, %s5
  %s8 = scalar_select 0, %s7, %s5
  loop: start=0, step=1, limit=4
  $region2: #{res1d_forward.1} parent=0 // loop_pre_header
    _
  $region3: #{res1d_forward.1} parent=0 // loop_header
    %s10 = sphi 0, %s14
    %p11 = scmp.ge.s32.totalorder %s10, 4
    %s17 = sphi 0, %s29
    %s18 = sphi 0, %s25
    %s19 = sphi 0, %s17
    %s20 = sphi 0, %s18
    %s21 = sphi 0, %s19
    %s22 = sphi 0, %s20
    %s32 = sphi 0, %s34
    %s35 = sphi 0, %s32
    %s36 = sphi 0, %s35
    %s52 = sphi 0, %s36
    %s56 = sphi 0, %s56
    %s58 = sphi 0, %s56
    %s59 = sphi 0, %s58
    %s73 = sphi 0, %s59
    %s77 = sphi 0, %s77
    %s79 = sphi 0, %s77
    %s80 = sphi 0, %s79
    %s94 = sphi 0, %s80
    %s98 = sphi 0, %s98
    %s100 = sphi 0, %s98
    %s101 = sphi 0, %s100
    %s115 = sphi 0, %s101
    %s123 = sphi 0, %s125
    %s126 = sphi 0, %s123
    %s127 = sphi 0, %s126
    %s143 = sphi 0, %s127
  $region4: #{res1d_forward.1} parent=0 // loop_header_branch
    %13 = sbr.rel (%p11) target = $region8
  $region5: #{res1d_forward.1} parent=0 // loop_body
    %s15 = ssub.s32 %s10, 1
    %s16 = ssub.s32 %s10, 2
    %s23 = sadd.s32 1, %s18
    %p24 = scmp.ge.s32.totalorder %s23, 1
    %s25 = scalar_select %p24, 0, %s23
    %s26 = sadd.s32 1, %s17
    %s27 = scalar_select %p24, %s26, %s17
    %p28 = scmp.ge.s32.totalorder %s27, 2
    %s29 = scalar_select %p28, 0, %s27
    %s30 = ssub.s32 %s17, %s29
    %p31 = scmp.eq.s32.totalorder %s30, 0
    %s33 = sadd.s32 %s32, 1
    %s34 = scalar_select %p31, %s32, %s33
    %p37 = pneg %p31
    %p38 = scmp.eq.s32.totalorder %s10, 1
    %p39 = por %p37, %p38
    %p40 = scmp.ne.s32.totalorder %s32, %s35
    %p41 = scmp.eq.s32.totalorder %s10, 0
    %p42 = por %p40, %p41
    %p43 = scmp.ne.s32.totalorder %s32, %s35
    %p44 = scmp.eq.s32.totalorder %s15, 1
    %p45 = por %p43, %p44
    %p46 = scmp.ne.s32.totalorder %s35, %s36
    %p47 = scmp.eq.s32.totalorder %s15, 0
    %p48 = por %p46, %p47
    %p49 = scmp.ne.s32.totalorder %s35, %s36
    %p50 = scmp.eq.s32.totalorder %s16, 1
    %p51 = por %p49, %p50
    %p53 = scmp.ne.s32.totalorder %s36, %s52
    %p54 = scmp.eq.s32.totalorder %s16, 0
    %p55 = por %p53, %p54
    %s57 = sadd.s32 %s56, 1
    %p60 = scmp.eq.s32.totalorder %s10, 1
    %p61 = scmp.ne.s32.totalorder %s56, %s58
    %p62 = scmp.eq.s32.totalorder %s10, 0
    %p63 = por %p61, %p62
    %p64 = scmp.ne.s32.totalorder %s56, %s58
    %p65 = scmp.eq.s32.totalorder %s15, 1
    %p66 = por %p64, %p65
    %p67 = scmp.ne.s32.totalorder %s58, %s59
    %p68 = scmp.eq.s32.totalorder %s15, 0
    %p69 = por %p67, %p68
    %p70 = scmp.ne.s32.totalorder %s58, %s59
    %p71 = scmp.eq.s32.totalorder %s16, 1
    %p72 = por %p70, %p71
    %p74 = scmp.ne.s32.totalorder %s59, %s73
    %p75 = scmp.eq.s32.totalorder %s16, 0
    %p76 = por %p74, %p75
    %s78 = sadd.s32 %s77, 1
    %p81 = scmp.eq.s32.totalorder %s10, 1
    %p82 = scmp.ne.s32.totalorder %s77, %s79
    %p83 = scmp.eq.s32.totalorder %s10, 0
    %p84 = por %p82, %p83
    %p85 = scmp.ne.s32.totalorder %s77, %s79
    %p86 = scmp.eq.s32.totalorder %s15, 1
    %p87 = por %p85, %p86
    %p88 = scmp.ne.s32.totalorder %s79, %s80
    %p89 = scmp.eq.s32.totalorder %s15, 0
    %p90 = por %p88, %p89
    %p91 = scmp.ne.s32.totalorder %s79, %s80
    %p92 = scmp.eq.s32.totalorder %s16, 1
    %p93 = por %p91, %p92
    %p95 = scmp.ne.s32.totalorder %s80, %s94
    %p96 = scmp.eq.s32.totalorder %s16, 0
    %p97 = por %p95, %p96
    %s99 = sadd.s32 %s98, 1
    %p102 = scmp.eq.s32.totalorder %s10, 1
    %p103 = scmp.ne.s32.totalorder %s98, %s100
    %p104 = scmp.eq.s32.totalorder %s10, 0
    %p105 = por %p103, %p104
    %p106 = scmp.ne.s32.totalorder %s98, %s100
    %p107 = scmp.eq.s32.totalorder %s15, 1
    %p108 = por %p106, %p107
    %p109 = scmp.ne.s32.totalorder %s100, %s101
    %p110 = scmp.eq.s32.totalorder %s15, 0
    %p111 = por %p109, %p110
    %p112 = scmp.ne.s32.totalorder %s100, %s101
    %p113 = scmp.eq.s32.totalorder %s16, 1
    %p114 = por %p112, %p113
    %p116 = scmp.ne.s32.totalorder %s101, %s115
    %p117 = scmp.eq.s32.totalorder %s16, 0
    %p118 = por %p116, %p117
    %s119 = ssub.s32 %s17, %s29
    %s120 = ssub.s32 %s18, %s25
    %s121 = sor.u32 %s119, %s120
    %p122 = scmp.eq.s32.totalorder %s121, 0
    %s124 = sadd.s32 %s123, 1
    %s125 = scalar_select %p122, %s123, %s124
    %p128 = pneg %p122
    %p129 = scmp.eq.s32.totalorder %s10, 1
    %p130 = por %p128, %p129
    %p131 = scmp.ne.s32.totalorder %s123, %s126
    %p132 = scmp.eq.s32.totalorder %s10, 0
    %p133 = por %p131, %p132
    %p134 = scmp.ne.s32.totalorder %s123, %s126
    %p135 = scmp.eq.s32.totalorder %s15, 1
    %p136 = por %p134, %p135
    %p137 = scmp.ne.s32.totalorder %s126, %s127
    %p138 = scmp.eq.s32.totalorder %s15, 0
    %p139 = por %p137, %p138
    %p140 = scmp.ne.s32.totalorder %s126, %s127
    %p141 = scmp.eq.s32.totalorder %s16, 1
    %p142 = por %p140, %p141
    %p144 = scmp.ne.s32.totalorder %s127, %s143
    %p145 = scmp.eq.s32.totalorder %s16, 0
    %p146 = por %p144, %p145
    %p147 = scmp.le.s32.totalorder 1, %s10
    %p148 = scmp.lt.s32.totalorder %s10, 3
    %p149 = pnand %p147, %p148
    %p150 = pneg %p149
    // Predicated region
    $region9: #{res1d_forward.1} parent=5 // pred_check
      _
    $region10: #{res1d_forward.1} parent=5 // pred_check_branch
      %152 = sbr.rel (%p149) target = $region12
    $region11: #{res1d_forward.1} parent=5 // pred_region
      %s153 = ssub.s32 %s10, 1
      // Predicated region
      $region13: #{res1d_forward.1} parent=11 // pred_check
        %p154 = pneg %p69
      $region14: #{res1d_forward.1} parent=11 // pred_check_branch
        %156 = sbr.rel (%p154) target = $region16
      $region15: #{res1d_forward.1} parent=11 // pred_region
        _
      $region16: #{res1d_forward.1} parent=11 // pred_fallthru
        _
      // Predicated region
      $region17: #{res1d_forward.1} parent=11 // pred_check
        %p157 = pneg %p90
      $region18: #{res1d_forward.1} parent=11 // pred_check_branch
        %159 = sbr.rel (%p157) target = $region20
      $region19: #{res1d_forward.1} parent=11 // pred_region
        _
      $region20: #{res1d_forward.1} parent=11 // pred_fallthru
        _
      // Predicated region
      $region21: #{res1d_forward.1} parent=11 // pred_check
        %p160 = pneg %p111
      $region22: #{res1d_forward.1} parent=11 // pred_check_branch
        %162 = sbr.rel (%p160) target = $region24
      $region23: #{res1d_forward.1} parent=11 // pred_region
        _
      $region24: #{res1d_forward.1} parent=11 // pred_fallthru
        _
    $region12: #{res1d_forward.1} parent=5 // pred_fallthru
      _
    %p163 = scmp.lt.s32.totalorder %s10, 2
    // Predicated region
    $region25: #{res1d_forward.1} parent=5 // pred_check
      %p164 = pneg %p163
    $region26: #{res1d_forward.1} parent=5 // pred_check_branch
      %166 = sbr.rel (%p164) target = $region28
    $region27: #{res1d_forward.1} parent=5 // pred_region
      // Predicated region
      $region29: #{res1d_forward.1} parent=27 // pred_check
        %p167 = pneg %p42
      $region30: #{res1d_forward.1} parent=27 // pred_check_branch
        %169 = sbr.rel (%p167) target = $region32
      $region31: #{res1d_forward.1} parent=27 // pred_region
        %p170 = scmp.lt.s32.totalorder %s17, 1
        %s171 = scalar_select %p170, %s17, 1
        %s172 = smul.addr %s171, 3
        %s173 = scalar_lea.vmem %s0, %s172
      $region32: #{res1d_forward.1} parent=27 // pred_fallthru
        _
    $region28: #{res1d_forward.1} parent=5 // pred_fallthru
      _
    %p174 = scmp.le.s32.totalorder 1, %s10
    %p175 = scmp.lt.s32.totalorder %s10, 3
    %p176 = pnand %p174, %p175
    %p177 = pneg %p176
    // Predicated region
    $region33: #{res1d_forward.1} parent=5 // pred_check
      _
    $region34: #{res1d_forward.1} parent=5 // pred_check_branch
      %179 = sbr.rel (%p176) target = $region36
    $region35: #{res1d_forward.1} parent=5 // pred_region
      %s180 = ssub.s32 %s10, 1
      %p181 = scmp.lt.s32.totalorder %s19, 1
      %s182 = scalar_select %p181, %s19, 1
      %s183 = smul.addr %s182, 3
      %s184 = scalar_lea.vmem %s0, %s183
      %p185 = pneg %p48
      %p186 = pneg %p45
      %p187 = pneg %p69
      %p188 = pneg %p66
      %p189 = pneg %p90
      %p190 = pneg %p87
      %p191 = pneg %p111
      %p192 = pneg %p108
      %p193 = pneg %p139
      %p194 = pneg %p136
      %p195 = scmp.lt.s32.totalorder %s19, 1
      %s196 = scalar_select %p195, %s19, 1
      %p197 = scmp.lt.s32.totalorder %s20, 0
      %s198 = scalar_select %p197, %s20, 0
      %s199 = smul.addr %s196, 4
      %s200 = sadd.s32 %s198, %s199
      %s201 = smul.addr %s200, 8
      %s202 = scalar_lea.vmem %s4, %s201
      %p203 = scmp.lt.s32.totalorder %s19, 1
      %s204 = scalar_select %p203, %s19, 1
      %s205 = smul.addr %s204, 3
      %s206 = scalar_lea.vmem %s0, %s205
      %p207 = scmp.lt.s32.totalorder %s19, 1
      %s208 = scalar_select %p207, %s19, 1
      %p209 = scmp.lt.s32.totalorder %s20, 0
      %s210 = scalar_select %p209, %s20, 0
      %s211 = smul.addr %s208, 4
      %s212 = sadd.s32 %s210, %s211
      %s213 = smul.addr %s212, 8
      %s214 = scalar_lea.vmem %s4, %s213
      %s216 = smul.u32 %s20, 128
      %s217 = sshra.s32 %s216, 7
      %s218 = sand.u32 %s216, 127
      %s219 = scalar_lea.vmem %s206, %s217
      %v220 = vld [vmem:[%s219] sm:$0x7]
      %v221 = vlaneseq
      %v222 = vand.u32 %v221, 127
      %v223 = vadd.s32 %v222, 128
      %v224 = vadd.s32 %v222, 256
      %s225 = ssub.s32 128, %s216
      %s226 = ssub.s32 144, %s216
      %v227 = vstv %s225
      %vm228 = vcmp.ge.s32.totalorder %v222, %v227
      %vm229 = vcmp.ge.s32.totalorder %v223, %v227
      %vm230 = vcmp.ge.s32.totalorder %v224, %v227
      %v231 = vstv %s226
      %vm232 = vcmp.lt.s32.totalorder %v222, %v231
      %vm233 = vcmp.lt.s32.totalorder %v223, %v231
      %vm234 = vcmp.lt.s32.totalorder %v224, %v231
      %vm235 = vmand %vm228, %vm232
      %vm236 = vmand %vm229, %vm233
      %vm237 = vmand %vm230, %vm234
      %v238 = vld [vmem:[%s1] sm:$0xff]
      %v239 = vld [vmem:[%s1 + $0x8] sm:$0xff]
      %v240 = vld [vmem:[%s1 + $0x10] sm:$0xff]
      %v241 = vld [vmem:[%s1 + $0x18] sm:$0xff]
      %v243 = vlaneseq
      %v244 = vshrl.u32 %v243, 7
      %v245 = vsub.s32 0, %v244
      %v246 = vrot.slane %v220, %v245
      %v247 = vlaneseq
      %v248 = vshrl.u32 %v247, 7
      %v249 = vsub.s32 1, %v248
      %v250 = vrot.slane %v220, %v249
      %v251 = vlaneseq
      %v252 = vshrl.u32 %v251, 7
      %v253 = vsub.s32 2, %v252
      %v254 = vrot.slane %v220, %v253
      %258 = vrot.lane.b32.xlu0 %v246, 1
      %v259 = vpop.permute.xlu0 %258
      %260 = vrot.lane.b32.xlu0 %v250, 1
      %v261 = vpop.permute.xlu0 %260
      %262 = vrot.lane.b32.xlu0 %v254, 1
      %v263 = vpop.permute.xlu0 %262
      %vm264 = vcmp.lt.s32.totalorder %v222, 1
      %v265 = vsel %vm264, %v261, %v263
      %v266 = vsel %vm264, %v259, %v261
      %v267 = vsel %vm264, %v263, %v259
      %268 = vrot.lane.b32.xlu0 %v246, 127
      %v269 = vpop.permute.xlu0 %268
      %270 = vrot.lane.b32.xlu0 %v250, 127
      %v271 = vpop.permute.xlu0 %270
      %272 = vrot.lane.b32.xlu0 %v254, 127
      %v273 = vpop.permute.xlu0 %272
      %vm274 = vcmp.lt.s32.totalorder %v222, 127
      %v275 = vsel %vm274, %v271, %v273
      %v276 = vsel %vm274, %v269, %v271
      %v277 = vsel %vm274, %v273, %v269
      %279 = vset.pattern.permute.xlu0 0
      %280 = vperm.xlu0 %279, %v238
      %v281 = vpop.permute.xlu0 %280
      %284 = vset.pattern.permute.xlu0 0
      %285 = vperm.xlu0 %284, %v239
      %v286 = vpop.permute.xlu0 %285
      %289 = vset.pattern.permute.xlu0 0
      %290 = vperm.xlu0 %289, %v240
      %v291 = vpop.permute.xlu0 %290
      %294 = vset.pattern.permute.xlu0 0
      %295 = vperm.xlu0 %294, %v241
      %v296 = vpop.permute.xlu0 %295
      %v298 = vlaneseq
      %v299 = vshrl.u32 %v298, 7
      %v300 = vsub.s32 0, %v299
      %v301 = vrot.slane %v267, %v300
      %v302 = vlaneseq
      %v303 = vshrl.u32 %v302, 7
      %v304 = vsub.s32 0, %v303
      %v305 = vrot.slane %v266, %v304
      %v306 = vlaneseq
      %v307 = vshrl.u32 %v306, 7
      %v308 = vsub.s32 0, %v307
      %v309 = vrot.slane %v265, %v308
      %v310 = vmul.f32 %v281, %v301
      %v311 = vmul.f32 %v281, %v305
      %v312 = vmul.f32 %v281, %v309
      %v313 = vmul.f32 %v286, %v301
      %v314 = vmul.f32 %v286, %v305
      %v315 = vmul.f32 %v286, %v309
      %v316 = vmul.f32 %v291, %v301
      %v317 = vmul.f32 %v291, %v305
      %v318 = vmul.f32 %v291, %v309
      %v319 = vmul.f32 %v296, %v301
      %v320 = vmul.f32 %v296, %v305
      %v321 = vmul.f32 %v296, %v309
      %322 = vset.pattern.permute.xlu0 1
      %323 = vperm.xlu0 %322, %v238
      %v324 = vpop.permute.xlu0 %323
      %326 = vset.pattern.permute.xlu0 1
      %327 = vperm.xlu0 %326, %v239
      %v328 = vpop.permute.xlu0 %327
      %330 = vset.pattern.permute.xlu0 1
      %331 = vperm.xlu0 %330, %v240
      %v332 = vpop.permute.xlu0 %331
      %334 = vset.pattern.permute.xlu0 1
      %335 = vperm.xlu0 %334, %v241
      %v336 = vpop.permute.xlu0 %335
      %v338 = vmul.f32 %v324, %v246
      %v339 = vmul.f32 %v324, %v250
      %v340 = vmul.f32 %v324, %v254
      %v341 = vmul.f32 %v328, %v246
      %v342 = vmul.f32 %v328, %v250
      %v343 = vmul.f32 %v328, %v254
      %v344 = vmul.f32 %v332, %v246
      %v345 = vmul.f32 %v332, %v250
      %v346 = vmul.f32 %v332, %v254
      %v347 = vmul.f32 %v336, %v246
      %v348 = vmul.f32 %v336, %v250
      %v349 = vmul.f32 %v336, %v254
      %v350 = vadd.f32 %v310, %v338
      %v351 = vadd.f32 %v311, %v339
      %v352 = vadd.f32 %v312, %v340
      %v353 = vadd.f32 %v313, %v341
      %v354 = vadd.f32 %v314, %v342
      %v355 = vadd.f32 %v315, %v343
      %v356 = vadd.f32 %v316, %v344
      %v357 = vadd.f32 %v317, %v345
      %v358 = vadd.f32 %v318, %v346
      %v359 = vadd.f32 %v319, %v347
      %v360 = vadd.f32 %v320, %v348
      %v361 = vadd.f32 %v321, %v349
      %362 = vset.pattern.permute.xlu0 2
      %363 = vperm.xlu0 %362, %v238
      %v364 = vpop.permute.xlu0 %363
      %366 = vset.pattern.permute.xlu0 2
      %367 = vperm.xlu0 %366, %v239
      %v368 = vpop.permute.xlu0 %367
      %370 = vset.pattern.permute.xlu0 2
      %371 = vperm.xlu0 %370, %v240
      %v372 = vpop.permute.xlu0 %371
      %374 = vset.pattern.permute.xlu0 2
      %375 = vperm.xlu0 %374, %v241
      %v376 = vpop.permute.xlu0 %375
      %v378 = vlaneseq
      %v379 = vshrl.u32 %v378, 7
      %v380 = vsub.s32 0, %v379
      %v381 = vrot.slane %v276, %v380
      %v382 = vlaneseq
      %v383 = vshrl.u32 %v382, 7
      %v384 = vsub.s32 0, %v383
      %v385 = vrot.slane %v275, %v384
      %v386 = vlaneseq
      %v387 = vshrl.u32 %v386, 7
      %v388 = vsub.s32 0, %v387
      %v389 = vrot.slane %v277, %v388
      %v390 = vmul.f32 %v364, %v381
      %v391 = vmul.f32 %v364, %v385
      %v392 = vmul.f32 %v364, %v389
      %v393 = vmul.f32 %v368, %v381
      %v394 = vmul.f32 %v368, %v385
      %v395 = vmul.f32 %v368, %v389
      %v396 = vmul.f32 %v372, %v381
      %v397 = vmul.f32 %v372, %v385
      %v398 = vmul.f32 %v372, %v389
      %v399 = vmul.f32 %v376, %v381
      %v400 = vmul.f32 %v376, %v385
      %v401 = vmul.f32 %v376, %v389
      %v402 = vadd.f32 %v350, %v390
      %v403 = vadd.f32 %v351, %v391
      %v404 = vadd.f32 %v352, %v392
      %v405 = vadd.f32 %v353, %v393
      %v406 = vadd.f32 %v354, %v394
      %v407 = vadd.f32 %v355, %v395
      %v408 = vadd.f32 %v356, %v396
      %v409 = vadd.f32 %v357, %v397
      %v410 = vadd.f32 %v358, %v398
      %v411 = vadd.f32 %v359, %v399
      %v412 = vadd.f32 %v360, %v400
      %v413 = vadd.f32 %v361, %v401
      %v414 = vmax.f32 %v402, 0.0
      %v415 = vmax.f32 %v403, 0.0
      %v416 = vmax.f32 %v404, 0.0
      %v417 = vmax.f32 %v405, 0.0
      %v418 = vmax.f32 %v406, 0.0
      %v419 = vmax.f32 %v407, 0.0
      %v420 = vmax.f32 %v408, 0.0
      %v421 = vmax.f32 %v409, 0.0
      %v422 = vmax.f32 %v410, 0.0
      %v423 = vmax.f32 %v411, 0.0
      %v424 = vmax.f32 %v412, 0.0
      %v425 = vmax.f32 %v413, 0.0
      %v426 = vsel %vm235, 1, 0
      %v427 = vsel %vm236, 1, 0
      %v428 = vsel %vm237, 1, 0
      %vm429 = vcmp.eq.s32.totalorder %v426, 1
      %vm430 = vcmp.eq.s32.totalorder %v427, 1
      %vm431 = vcmp.eq.s32.totalorder %v428, 1
      %v432 = vsel %vm429, %v414, 0.0
      %v433 = vsel %vm430, %v415, 0.0
      %v434 = vsel %vm431, %v416, 0.0
      %v435 = vsel %vm429, %v417, 0.0
      %v436 = vsel %vm430, %v418, 0.0
      %v437 = vsel %vm431, %v419, 0.0
      %v438 = vsel %vm429, %v420, 0.0
      %v439 = vsel %vm430, %v421, 0.0
      %v440 = vsel %vm431, %v422, 0.0
      %v441 = vsel %vm429, %v423, 0.0
      %v442 = vsel %vm430, %v424, 0.0
      %v443 = vsel %vm431, %v425, 0.0
      %v444 = vld [vmem:[%s2] sm:$0xf]
      %v445 = vld [vmem:[%s2 + $0x4] sm:$0xf]
      %v446 = vld [vmem:[%s3] sm:$0xf]
      %v447 = vld [vmem:[%s3 + $0x4] sm:$0xf]
      %v448 = vld [vmem:[%s3 + $0x8] sm:$0xf]
      %v449 = vld [vmem:[%s3 + $0xc] sm:$0xf]
      %v450 = vpack.c.bf16 %v435, %v432
      %v451 = vpack.c.bf16 %v436, %v433
      %v452 = vpack.c.bf16 %v437, %v434
      %v453 = vpack.c.bf16 %v441, %v438
      %v454 = vpack.c.bf16 %v442, %v439
      %v455 = vpack.c.bf16 %v443, %v440
      %v458 = vunpack.c.l.b16 %v444
      %v459 = vunpack.c.l.b16 %v445
      %v460 = vpack.c.b16 %v459, %v458
      %vm461 = vcmask 261120
      %v463 = vsel %vm461, %v460, 0
      %465 = vmatprep.subr.bf16.mxu0 %v451
      %466 = vmatpush1.bf16.msra.mxu0 %v450
      %467 = vmatprep.subr.bf16.mxu0 %v454
      %468 = vmatpush1.bf16.msra.mxu0 %v453
      %469 = vmatprep.subr.bf16.mxu0 0
      %470 = vmatpush1.bf16.msra.mxu0 0
      %471 = vmatprep.subr.bf16.mxu0 0
      %472 = vmatpush1.bf16.msra.mxu0 0
      %473 = vmatprep.subr.bf16.mxu0 0
      %474 = vmatpush1.bf16.msra.mxu0 0
      %475 = vmatprep.subr.bf16.mxu0 0
      %476 = vmatpush1.bf16.msra.mxu0 0
      %477 = vmatprep.subr.bf16.mxu0 0
      %478 = vmatpush1.bf16.msra.mxu0 0
      %479 = vmatprep.subr.bf16.mxu0 0
      %480 = vmatpush1.bf16.msra.mxu0 0
      %481 = vmatprep.subr.bf16.mxu0 0
      %482 = vmatpush1.bf16.msra.mxu0 0
      %483 = vmatprep.subr.bf16.mxu0 0
      %484 = vmatpush1.bf16.msra.mxu0 0
      %485 = vmatprep.subr.bf16.mxu0 0
      %486 = vmatpush1.bf16.msra.mxu0 0
      %487 = vmatprep.subr.bf16.mxu0 0
      %488 = vmatpush1.bf16.msra.mxu0 0
      %489 = vmatprep.subr.bf16.mxu0 0
      %490 = vmatpush1.bf16.msra.mxu0 0
      %491 = vmatprep.subr.bf16.mxu0 0
      %492 = vmatpush1.bf16.msra.mxu0 0
      %493 = vmatprep.subr.bf16.mxu0 0
      %494 = vmatpush1.bf16.msra.mxu0 0
      %495 = vmatprep.subr.bf16.mxu0 0
      %496 = vmatpush1.bf16.msra.mxu0 0
      %497 = vmatprep.mubr.bf16.mxu0 0
      %498 = vmatmul.mubr.bf16.gmra.mrb[0].mxu0 %v463
      %v499 = vpop.f32.mrb[0].mxu0
      %v500 = vadd.f32 0.0, %v499
      %v501 = vpop.f32.mrb[0].mxu0
      %v502 = vadd.f32 0.0, %v501
      %v503 = vpop.f32.mrb[0].mxu0
      %v504 = vadd.f32 0.0, %v503
      %v505 = vpop.f32.mrb[0].mxu0
      %v506 = vadd.f32 0.0, %v505
      %507 = vdwg.mxu0
      %508 = vmatprep.subr.bf16.mxu0 0
      %509 = vmatpush1.bf16.msra.mxu0 %v452
      %510 = vmatprep.subr.bf16.mxu0 0
      %511 = vmatpush1.bf16.msra.mxu0 %v455
      %512 = vmatprep.subr.bf16.mxu0 0
      %513 = vmatpush1.bf16.msra.mxu0 0
      %514 = vmatprep.subr.bf16.mxu0 0
      %515 = vmatpush1.bf16.msra.mxu0 0
      %516 = vmatprep.subr.bf16.mxu0 0
      %517 = vmatpush1.bf16.msra.mxu0 0
      %518 = vmatprep.subr.bf16.mxu0 0
      %519 = vmatpush1.bf16.msra.mxu0 0
      %520 = vmatprep.subr.bf16.mxu0 0
      %521 = vmatpush1.bf16.msra.mxu0 0
      %522 = vmatprep.subr.bf16.mxu0 0
      %523 = vmatpush1.bf16.msra.mxu0 0
      %524 = vmatprep.subr.bf16.mxu0 0
      %525 = vmatpush1.bf16.msra.mxu0 0
      %526 = vmatprep.subr.bf16.mxu0 0
      %527 = vmatpush1.bf16.msra.mxu0 0
      %528 = vmatprep.subr.bf16.mxu0 0
      %529 = vmatpush1.bf16.msra.mxu0 0
      %530 = vmatprep.subr.bf16.mxu0 0
      %531 = vmatpush1.bf16.msra.mxu0 0
      %532 = vmatprep.subr.bf16.mxu0 0
      %533 = vmatpush1.bf16.msra.mxu0 0
      %534 = vmatprep.subr.bf16.mxu0 0
      %535 = vmatpush1.bf16.msra.mxu0 0
      %536 = vmatprep.subr.bf16.mxu0 0
      %537 = vmatpush1.bf16.msra.mxu0 0
      %538 = vmatprep.subr.bf16.mxu0 0
      %539 = vmatpush1.bf16.msra.mxu0 0
      %540 = vmatprep.mubr.bf16.mxu0 0
      %541 = vmatmul.mubr.bf16.gmra.mrb[0].mxu0 %v463
      %v542 = vpop.f32.mrb[0].mxu0
      %v543 = vadd.f32 0.0, %v542
      %v544 = vpop.f32.mrb[0].mxu0
      %v545 = vpop.f32.mrb[0].mxu0
      %v546 = vadd.f32 0.0, %v545
      %v547 = vpop.f32.mrb[0].mxu0
      %548 = vdwg.mxu0
      %v549 = vmax.f32 %v500, 0.0
      %v550 = vmax.f32 %v502, 0.0
      %v551 = vmax.f32 %v543, 0.0
      %v552 = vmax.f32 %v504, 0.0
      %v553 = vmax.f32 %v506, 0.0
      %v554 = vmax.f32 %v546, 0.0
      %555 = vrot.lane.b32.xlu0 %v549, 1
      %v556 = vpop.permute.xlu0 %555
      %557 = vrot.lane.b32.xlu0 %v552, 1
      %v558 = vpop.permute.xlu0 %557
      %559 = vrot.lane.b32.xlu0 %v550, 1
      %v560 = vpop.permute.xlu0 %559
      %561 = vrot.lane.b32.xlu0 %v553, 1
      %v562 = vpop.permute.xlu0 %561
      %563 = vrot.lane.b32.xlu0 %v551, 1
      %v564 = vpop.permute.xlu0 %563
      %565 = vrot.lane.b32.xlu0 %v554, 1
      %v566 = vpop.permute.xlu0 %565
      %v567 = vsel %vm264, %v560, %v564
      %v568 = vsel %vm264, %v562, %v566
      %v569 = vsel %vm264, %v556, %v560
      %v570 = vsel %vm264, %v558, %v562
      %v571 = vsel %vm264, %v564, %v556
      %v572 = vsel %vm264, %v566, %v558
      %573 = vrot.lane.b32.xlu0 %v549, 127
      %v574 = vpop.permute.xlu0 %573
      %575 = vrot.lane.b32.xlu0 %v552, 127
      %v576 = vpop.permute.xlu0 %575
      %577 = vrot.lane.b32.xlu0 %v550, 127
      %v578 = vpop.permute.xlu0 %577
      %579 = vrot.lane.b32.xlu0 %v553, 127
      %v580 = vpop.permute.xlu0 %579
      %581 = vrot.lane.b32.xlu0 %v551, 127
      %v582 = vpop.permute.xlu0 %581
      %583 = vrot.lane.b32.xlu0 %v554, 127
      %v584 = vpop.permute.xlu0 %583
      %v585 = vsel %vm274, %v578, %v582
      %v586 = vsel %vm274, %v580, %v584
      %v587 = vsel %vm274, %v574, %v578
      %v588 = vsel %vm274, %v576, %v580
      %v589 = vsel %vm274, %v582, %v574
      %v590 = vsel %vm274, %v584, %v576
      %v591 = vpack.c.bf16 %v572, %v571
      %v592 = vpack.c.bf16 %v570, %v569
      %v593 = vpack.c.bf16 %v568, %v567
      %v594 = vpack.c.bf16 %v552, %v549
      %v595 = vpack.c.bf16 %v553, %v550
      %v596 = vpack.c.bf16 %v554, %v551
      %v597 = vpack.c.bf16 %v588, %v587
      %v598 = vpack.c.bf16 %v586, %v585
      %v599 = vpack.c.bf16 %v590, %v589
      %v604 = vunpack.c.l.b16 %v446
      %v605 = vunpack.c.l.b16 %v447
      %v606 = vunpack.c.l.b16 %v448
      %v607 = vunpack.c.l.b16 %v449
      %v608 = vpack.c.b16 %v605, %v604
      %v609 = vpack.c.b16 %v607, %v606
      %vm610 = vcmask 392192
      %v612 = vsel %vm610, %v608, 0
      %v615 = vsel %vm610, %v609, 0
      %617 = vmatprep.subr.bf16.mxu0 %v592
      %618 = vmatpush1.bf16.msra.mxu0 %v591
      %619 = vmatprep.subr.bf16.mxu0 %v595
      %620 = vmatpush1.bf16.msra.mxu0 %v594
      %621 = vmatprep.subr.bf16.mxu0 %v598
      %622 = vmatpush1.bf16.msra.mxu0 %v597
      %623 = vmatprep.subr.bf16.mxu0 0
      %624 = vmatpush1.bf16.msra.mxu0 0
      %625 = vmatprep.subr.bf16.mxu0 0
      %626 = vmatpush1.bf16.msra.mxu0 0
      %627 = vmatprep.subr.bf16.mxu0 0
      %628 = vmatpush1.bf16.msra.mxu0 0
      %629 = vmatprep.subr.bf16.mxu0 0
      %630 = vmatpush1.bf16.msra.mxu0 0
      %631 = vmatprep.subr.bf16.mxu0 0
      %632 = vmatpush1.bf16.msra.mxu0 0
      %633 = vmatprep.subr.bf16.mxu0 0
      %634 = vmatpush1.bf16.msra.mxu0 0
      %635 = vmatprep.subr.bf16.mxu0 0
      %636 = vmatpush1.bf16.msra.mxu0 0
      %637 = vmatprep.subr.bf16.mxu0 0
      %638 = vmatpush1.bf16.msra.mxu0 0
      %639 = vmatprep.subr.bf16.mxu0 0
      %640 = vmatpush1.bf16.msra.mxu0 0
      %641 = vmatprep.subr.bf16.mxu0 0
      %642 = vmatpush1.bf16.msra.mxu0 0
      %643 = vmatprep.subr.bf16.mxu0 0
      %644 = vmatpush1.bf16.msra.mxu0 0
      %645 = vmatprep.subr.bf16.mxu0 0
      %646 = vmatpush1.bf16.msra.mxu0 0
      %647 = vmatprep.subr.bf16.mxu0 0
      %648 = vmatpush1.bf16.msra.mxu0 0
      %649 = vmatprep.mubr.bf16.mxu0 0
      %650 = vmatmul.mubr.bf16.gmra.mrb[0].mxu0 %v612
      %v651 = vpop.f32.mrb[0].mxu0
      %v652 = vadd.f32 0.0, %v651
      %v653 = vpop.f32.mrb[0].mxu0
      %v654 = vadd.f32 0.0, %v653
      %v655 = vpop.f32.mrb[0].mxu0
      %v656 = vadd.f32 0.0, %v655
      %v657 = vpop.f32.mrb[0].mxu0
      %v658 = vadd.f32 0.0, %v657
      %659 = vmatprep.mubr.bf16.mxu0 0
      %660 = vmatmul.mubr.bf16.gmra.mrb[0].mxu0 %v615
      %v661 = vpop.f32.mrb[0].mxu0
      %v662 = vadd.f32 0.0, %v661
      %v663 = vpop.f32.mrb[0].mxu0
      %v664 = vadd.f32 0.0, %v663
      %v665 = vpop.f32.mrb[0].mxu0
      %v666 = vadd.f32 0.0, %v665
      %v667 = vpop.f32.mrb[0].mxu0
      %v668 = vadd.f32 0.0, %v667
      %669 = vdwg.mxu0
      %670 = vmatprep.subr.bf16.mxu0 0
      %671 = vmatpush1.bf16.msra.mxu0 %v593
      %672 = vmatprep.subr.bf16.mxu0 0
      %673 = vmatpush1.bf16.msra.mxu0 %v596
      %674 = vmatprep.subr.bf16.mxu0 0
      %675 = vmatpush1.bf16.msra.mxu0 %v599
      %676 = vmatprep.subr.bf16.mxu0 0
      %677 = vmatpush1.bf16.msra.mxu0 0
      %678 = vmatprep.subr.bf16.mxu0 0
      %679 = vmatpush1.bf16.msra.mxu0 0
      %680 = vmatprep.subr.bf16.mxu0 0
      %681 = vmatpush1.bf16.msra.mxu0 0
      %682 = vmatprep.subr.bf16.mxu0 0
      %683 = vmatpush1.bf16.msra.mxu0 0
      %684 = vmatprep.subr.bf16.mxu0 0
      %685 = vmatpush1.bf16.msra.mxu0 0
      %686 = vmatprep.subr.bf16.mxu0 0
      %687 = vmatpush1.bf16.msra.mxu0 0
      %688 = vmatprep.subr.bf16.mxu0 0
      %689 = vmatpush1.bf16.msra.mxu0 0
      %690 = vmatprep.subr.bf16.mxu0 0
      %691 = vmatpush1.bf16.msra.mxu0 0
      %692 = vmatprep.subr.bf16.mxu0 0
      %693 = vmatpush1.bf16.msra.mxu0 0
      %694 = vmatprep.subr.bf16.mxu0 0
      %695 = vmatpush1.bf16.msra.mxu0 0
      %696 = vmatprep.subr.bf16.mxu0 0
      %697 = vmatpush1.bf16.msra.mxu0 0
      %698 = vmatprep.subr.bf16.mxu0 0
      %699 = vmatpush1.bf16.msra.mxu0 0
      %700 = vmatprep.subr.bf16.mxu0 0
      %701 = vmatpush1.bf16.msra.mxu0 0
      %702 = vmatprep.mubr.bf16.mxu0 0
      %703 = vmatmul.mubr.bf16.gmra.mrb[0].mxu0 %v612
      %v704 = vpop.f32.mrb[0].mxu0
      %v705 = vadd.f32 0.0, %v704
      %v706 = vpop.f32.mrb[0].mxu0
      %v707 = vpop.f32.mrb[0].mxu0
      %v708 = vadd.f32 0.0, %v707
      %v709 = vpop.f32.mrb[0].mxu0
      %710 = vmatprep.mubr.bf16.mxu0 0
      %711 = vmatmul.mubr.bf16.gmra.mrb[0].mxu0 %v615
      %v712 = vpop.f32.mrb[0].mxu0
      %v713 = vadd.f32 0.0, %v712
      %v714 = vpop.f32.mrb[0].mxu0
      %v715 = vpop.f32.mrb[0].mxu0
      %v716 = vadd.f32 0.0, %v715
      %v717 = vpop.f32.mrb[0].mxu0
      %718 = vdwg.mxu0
      %v719 = vmax.f32 %v652, 0.0
      %v720 = vmax.f32 %v654, 0.0
      %v721 = vmax.f32 %v705, 0.0
      %v722 = vmax.f32 %v656, 0.0
      %v723 = vmax.f32 %v658, 0.0
      %v724 = vmax.f32 %v708, 0.0
      %v725 = vmax.f32 %v662, 0.0
      %v726 = vmax.f32 %v664, 0.0
      %v727 = vmax.f32 %v713, 0.0
      %v728 = vmax.f32 %v666, 0.0
      %v729 = vmax.f32 %v668, 0.0
      %v730 = vmax.f32 %v716, 0.0
      %v731 = vadd.f32 %v719, %v432
      %v732 = vadd.f32 %v720, %v433
      %v733 = vadd.f32 %v721, %v434
      %v734 = vadd.f32 %v722, %v435
      %v735 = vadd.f32 %v723, %v436
      %v736 = vadd.f32 %v724, %v437
      %v737 = vadd.f32 %v725, %v438
      %v738 = vadd.f32 %v726, %v439
      %v739 = vadd.f32 %v727, %v440
      %v740 = vadd.f32 %v728, %v441
      %v741 = vadd.f32 %v729, %v442
      %v742 = vadd.f32 %v730, %v443
      %v743 = vsel %vm429, %v731, 0.0
      %v744 = vsel %vm430, %v732, 0.0
      %v745 = vsel %vm431, %v733, 0.0
      %v746 = vsel %vm429, %v734, 0.0
      %v747 = vsel %vm430, %v735, 0.0
      %v748 = vsel %vm431, %v736, 0.0
      %v749 = vsel %vm429, %v737, 0.0
      %v750 = vsel %vm430, %v738, 0.0
      %v751 = vsel %vm431, %v739, 0.0
      %v752 = vsel %vm429, %v740, 0.0
      %v753 = vsel %vm430, %v741, 0.0
      %v754 = vsel %vm431, %v742, 0.0
      %s755 = scalar_lea.vmem %s2, 8
      %v756 = vld [vmem:[%s755] sm:$0xf]
      %v757 = vld [vmem:[%s755 + $0x4] sm:$0xf]
      %s758 = scalar_lea.vmem %s3, 16
      %v759 = vld [vmem:[%s758] sm:$0xf]
      %v760 = vld [vmem:[%s758 + $0x4] sm:$0xf]
      %v761 = vld [vmem:[%s758 + $0x8] sm:$0xf]
      %v762 = vld [vmem:[%s758 + $0xc] sm:$0xf]
      %v763 = vpack.c.bf16 %v746, %v743
      %v764 = vpack.c.bf16 %v747, %v744
      %v765 = vpack.c.bf16 %v748, %v745
      %v766 = vpack.c.bf16 %v752, %v749
      %v767 = vpack.c.bf16 %v753, %v750
      %v768 = vpack.c.bf16 %v754, %v751
      %v771 = vunpack.c.l.b16 %v756
      %v772 = vunpack.c.l.b16 %v757
      %v773 = vpack.c.b16 %v772, %v771
      %v775 = vsel %vm461, %v773, 0
      %777 = vmatprep.subr.bf16.mxu0 %v764
      %778 = vmatpush1.bf16.msra.mxu0 %v763
      %779 = vmatprep.subr.bf16.mxu0 %v767
      %780 = vmatpush1.bf16.msra.mxu0 %v766
      %781 = vmatprep.subr.bf16.mxu0 0
      %782 = vmatpush1.bf16.msra.mxu0 0
      %783 = vmatprep.subr.bf16.mxu0 0
      %784 = vmatpush1.bf16.msra.mxu0 0
      %785 = vmatprep.subr.bf16.mxu0 0
      %786 = vmatpush1.bf16.msra.mxu0 0
      %787 = vmatprep.subr.bf16.mxu0 0
      %788 = vmatpush1.bf16.msra.mxu0 0
      %789 = vmatprep.subr.bf16.mxu0 0
      %790 = vmatpush1.bf16.msra.mxu0 0
      %791 = vmatprep.subr.bf16.mxu0 0
      %792 = vmatpush1.bf16.msra.mxu0 0
      %793 = vmatprep.subr.bf16.mxu0 0
      %794 = vmatpush1.bf16.msra.mxu0 0
      %795 = vmatprep.subr.bf16.mxu0 0
      %796 = vmatpush1.bf16.msra.mxu0 0
      %797 = vmatprep.subr.bf16.mxu0 0
      %798 = vmatpush1.bf16.msra.mxu0 0
      %799 = vmatprep.subr.bf16.mxu0 0
      %800 = vmatpush1.bf16.msra.mxu0 0
      %801 = vmatprep.subr.bf16.mxu0 0
      %802 = vmatpush1.bf16.msra.mxu0 0
      %803 = vmatprep.subr.bf16.mxu0 0
      %804 = vmatpush1.bf16.msra.mxu0 0
      %805 = vmatprep.subr.bf16.mxu0 0
      %806 = vmatpush1.bf16.msra.mxu0 0
      %807 = vmatprep.subr.bf16.mxu0 0
      %808 = vmatpush1.bf16.msra.mxu0 0
      %809 = vmatprep.mubr.bf16.mxu0 0
      %810 = vmatmul.mubr.bf16.gmra.mrb[0].mxu0 %v775
      %v811 = vpop.f32.mrb[0].mxu0
      %v812 = vadd.f32 0.0, %v811
      %v813 = vpop.f32.mrb[0].mxu0
      %v814 = vadd.f32 0.0, %v813
      %v815 = vpop.f32.mrb[0].mxu0
      %v816 = vadd.f32 0.0, %v815
      %v817 = vpop.f32.mrb[0].mxu0
      %v818 = vadd.f32 0.0, %v817
      %819 = vdwg.mxu0
      %820 = vmatprep.subr.bf16.mxu0 0
      %821 = vmatpush1.bf16.msra.mxu0 %v765
      %822 = vmatprep.subr.bf16.mxu0 0
      %823 = vmatpush1.bf16.msra.mxu0 %v768
      %824 = vmatprep.subr.bf16.mxu0 0
      %825 = vmatpush1.bf16.msra.mxu0 0
      %826 = vmatprep.subr.bf16.mxu0 0
      %827 = vmatpush1.bf16.msra.mxu0 0
      %828 = vmatprep.subr.bf16.mxu0 0
      %829 = vmatpush1.bf16.msra.mxu0 0
      %830 = vmatprep.subr.bf16.mxu0 0
      %831 = vmatpush1.bf16.msra.mxu0 0
      %832 = vmatprep.subr.bf16.mxu0 0
      %833 = vmatpush1.bf16.msra.mxu0 0
      %834 = vmatprep.subr.bf16.mxu0 0
      %835 = vmatpush1.bf16.msra.mxu0 0
      %836 = vmatprep.subr.bf16.mxu0 0
      %837 = vmatpush1.bf16.msra.mxu0 0
      %838 = vmatprep.subr.bf16.mxu0 0
      %839 = vmatpush1.bf16.msra.mxu0 0
      %840 = vmatprep.subr.bf16.mxu0 0
      %841 = vmatpush1.bf16.msra.mxu0 0
      %842 = vmatprep.subr.bf16.mxu0 0
      %843 = vmatpush1.bf16.msra.mxu0 0
      %844 = vmatprep.subr.bf16.mxu0 0
      %845 = vmatpush1.bf16.msra.mxu0 0
      %846 = vmatprep.subr.bf16.mxu0 0
      %847 = vmatpush1.bf16.msra.mxu0 0
      %848 = vmatprep.subr.bf16.mxu0 0
      %849 = vmatpush1.bf16.msra.mxu0 0
      %850 = vmatprep.subr.bf16.mxu0 0
      %851 = vmatpush1.bf16.msra.mxu0 0
      %852 = vmatprep.mubr.bf16.mxu0 0
      %853 = vmatmul.mubr.bf16.gmra.mrb[0].mxu0 %v775
      %v854 = vpop.f32.mrb[0].mxu0
      %v855 = vadd.f32 0.0, %v854
      %v856 = vpop.f32.mrb[0].mxu0
      %v857 = vpop.f32.mrb[0].mxu0
      %v858 = vadd.f32 0.0, %v857
      %v859 = vpop.f32.mrb[0].mxu0
      %860 = vdwg.mxu0
      %v861 = vmax.f32 %v812, 0.0
      %v862 = vmax.f32 %v814, 0.0
      %v863 = vmax.f32 %v855, 0.0
      %v864 = vmax.f32 %v816, 0.0
      %v865 = vmax.f32 %v818, 0.0
      %v866 = vmax.f32 %v858, 0.0
      %867 = vrot.lane.b32.xlu0 %v861, 1
      %v868 = vpop.permute.xlu0 %867
      %869 = vrot.lane.b32.xlu0 %v864, 1
      %v870 = vpop.permute.xlu0 %869
      %871 = vrot.lane.b32.xlu0 %v862, 1
      %v872 = vpop.permute.xlu0 %871
      %873 = vrot.lane.b32.xlu0 %v865, 1
      %v874 = vpop.permute.xlu0 %873
      %875 = vrot.lane.b32.xlu0 %v863, 1
      %v876 = vpop.permute.xlu0 %875
      %877 = vrot.lane.b32.xlu0 %v866, 1
      %v878 = vpop.permute.xlu0 %877
      %v879 = vsel %vm264, %v868, %v872
      %v880 = vsel %vm264, %v870, %v874
      %v881 = vsel %vm264, %v876, %v868
      %v882 = vsel %vm264, %v878, %v870
      %883 = vrot.lane.b32.xlu0 %v861, 127
      %v884 = vpop.permute.xlu0 %883
      %885 = vrot.lane.b32.xlu0 %v864, 127
      %v886 = vpop.permute.xlu0 %885
      %887 = vrot.lane.b32.xlu0 %v862, 127
      %v888 = vpop.permute.xlu0 %887
      %889 = vrot.lane.b32.xlu0 %v865, 127
      %v890 = vpop.permute.xlu0 %889
      %891 = vrot.lane.b32.xlu0 %v863, 127
      %v892 = vpop.permute.xlu0 %891
      %893 = vrot.lane.b32.xlu0 %v866, 127
      %v894 = vpop.permute.xlu0 %893
      %v895 = vsel %vm274, %v888, %v892
      %v896 = vsel %vm274, %v890, %v894
      %v897 = vsel %vm274, %v884, %v888
      %v898 = vsel %vm274, %v886, %v890
      %v899 = vpack.c.bf16 %v882, %v881
      %v900 = vpack.c.bf16 %v880, %v879
      %v901 = vpack.c.bf16 %v864, %v861
      %v902 = vpack.c.bf16 %v865, %v862
      %v903 = vpack.c.bf16 %v898, %v897
      %v904 = vpack.c.bf16 %v896, %v895
      %v909 = vunpack.c.l.b16 %v759
      %v910 = vunpack.c.l.b16 %v760
      %v911 = vunpack.c.l.b16 %v761
      %v912 = vunpack.c.l.b16 %v762
      %v913 = vpack.c.b16 %v910, %v909
      %v914 = vpack.c.b16 %v912, %v911
      %v916 = vsel %vm610, %v913, 0
      %v919 = vsel %vm610, %v914, 0
      %921 = vmatprep.subr.bf16.mxu0 %v900
      %922 = vmatpush1.bf16.msra.mxu0 %v899
      %923 = vmatprep.subr.bf16.mxu0 %v902
      %924 = vmatpush1.bf16.msra.mxu0 %v901
      %925 = vmatprep.subr.bf16.mxu0 %v904
      %926 = vmatpush1.bf16.msra.mxu0 %v903
      %927 = vmatprep.subr.bf16.mxu0 0
      %928 = vmatpush1.bf16.msra.mxu0 0
      %929 = vmatprep.subr.bf16.mxu0 0
      %930 = vmatpush1.bf16.msra.mxu0 0
      %931 = vmatprep.subr.bf16.mxu0 0
      %932 = vmatpush1.bf16.msra.mxu0 0
      %933 = vmatprep.subr.bf16.mxu0 0
      %934 = vmatpush1.bf16.msra.mxu0 0
      %935 = vmatprep.subr.bf16.mxu0 0
      %936 = vmatpush1.bf16.msra.mxu0 0
      %937 = vmatprep.subr.bf16.mxu0 0
      %938 = vmatpush1.bf16.msra.mxu0 0
      %939 = vmatprep.subr.bf16.mxu0 0
      %940 = vmatpush1.bf16.msra.mxu0 0
      %941 = vmatprep.subr.bf16.mxu0 0
      %942 = vmatpush1.bf16.msra.mxu0 0
      %943 = vmatprep.subr.bf16.mxu0 0
      %944 = vmatpush1.bf16.msra.mxu0 0
      %945 = vmatprep.subr.bf16.mxu0 0
      %946 = vmatpush1.bf16.msra.mxu0 0
      %947 = vmatprep.subr.bf16.mxu0 0
      %948 = vmatpush1.bf16.msra.mxu0 0
      %949 = vmatprep.subr.bf16.mxu0 0
      %950 = vmatpush1.bf16.msra.mxu0 0
      %951 = vmatprep.subr.bf16.mxu0 0
      %952 = vmatpush1.bf16.msra.mxu0 0
      %953 = vmatprep.mubr.bf16.mxu0 0
      %954 = vmatmul.mubr.bf16.gmra.mrb[0].mxu0 %v916
      %v955 = vpop.f32.mrb[0].mxu0
      %v956 = vpop.f32.mrb[0].mxu0
      %v957 = vadd.f32 0.0, %v956
      %v958 = vpop.f32.mrb[0].mxu0
      %v959 = vpop.f32.mrb[0].mxu0
      %v960 = vadd.f32 0.0, %v959
      %961 = vmatprep.mubr.bf16.mxu0 0
      %962 = vmatmul.mubr.bf16.gmra.mrb[0].mxu0 %v919
      %v963 = vpop.f32.mrb[0].mxu0
      %v964 = vpop.f32.mrb[0].mxu0
      %v965 = vadd.f32 0.0, %v964
      %v966 = vpop.f32.mrb[0].mxu0
      %v967 = vpop.f32.mrb[0].mxu0
      %v968 = vadd.f32 0.0, %v967
      %969 = vdwg.mxu0
      %v970 = vmax.f32 %v957, 0.0
      %v971 = vmax.f32 %v960, 0.0
      %v972 = vmax.f32 %v965, 0.0
      %v973 = vmax.f32 %v968, 0.0
      %v974 = vadd.f32 %v970, %v744
      %v975 = vadd.f32 %v971, %v747
      %v976 = vadd.f32 %v972, %v750
      %v977 = vadd.f32 %v973, %v753
      %v978 = vsel %vm430, %v974, 0.0
      %v979 = vsel %vm430, %v975, 0.0
      %v980 = vsel %vm430, %v976, 0.0
      %v981 = vsel %vm430, %v977, 0.0
      %982 = vst [vmem:[%s214] sm:$0xff] %v978
      %983 = vst [vmem:[%s214 + $0x8] sm:$0xff] %v979
      %984 = vst [vmem:[%s214 + $0x10] sm:$0xff] %v980
      %985 = vst [vmem:[%s214 + $0x18] sm:$0xff] %v981
      %p986 = scmp.lt.s32.totalorder %s19, 1
      %s987 = scalar_select %p986, %s19, 1
      %p988 = scmp.lt.s32.totalorder %s20, 0
      %s989 = scalar_select %p988, %s20, 0
      %s990 = smul.addr %s987, 4
      %s991 = sadd.s32 %s989, %s990
      %s992 = smul.addr %s991, 8
      %s993 = scalar_lea.vmem %s4, %s992
      // Predicated region
      $region37: #{res1d_forward.1} parent=35 // pred_check
        %p994 = pneg %p136
      $region38: #{res1d_forward.1} parent=35 // pred_check_branch
        %996 = sbr.rel (%p994) target = $region40
      $region39: #{res1d_forward.1} parent=35 // pred_region
        _
      $region40: #{res1d_forward.1} parent=35 // pred_fallthru
        _
    $region36: #{res1d_forward.1} parent=5 // pred_fallthru
      _
    %p997 = scmp.le.s32.totalorder 2, %s10
    // Predicated region
    $region41: #{res1d_forward.1} parent=5 // pred_check
      %p998 = pneg %p997
    $region42: #{res1d_forward.1} parent=5 // pred_check_branch
      %1000 = sbr.rel (%p998) target = $region44
    $region43: #{res1d_forward.1} parent=5 // pred_region
      %s1001 = ssub.s32 %s10, 2
      // Predicated region
      $region45: #{res1d_forward.1} parent=43 // pred_check
        %p1002 = pneg %p142
      $region46: #{res1d_forward.1} parent=43 // pred_check_branch
        %1004 = sbr.rel (%p1002) target = $region48
      $region47: #{res1d_forward.1} parent=43 // pred_region
        %p1005 = scmp.lt.s32.totalorder %s21, 1
        %s1006 = scalar_select %p1005, %s21, 1
        %p1007 = scmp.lt.s32.totalorder %s22, 0
        %s1008 = scalar_select %p1007, %s22, 0
        %s1009 = smul.addr %s1006, 4
        %s1010 = sadd.s32 %s1008, %s1009
        %s1011 = smul.addr %s1010, 8
        %s1012 = scalar_lea.vmem %s4, %s1011
      $region48: #{res1d_forward.1} parent=43 // pred_fallthru
        _
    $region44: #{res1d_forward.1} parent=5 // pred_fallthru
      _
  $region6: #{res1d_forward.1} parent=0 // loop_footer
    %s14 = sadd.s32 1, %s10
  $region7: #{res1d_forward.1} parent=0 // loop_footer_branch
    %9 = sbr.rel target = $region3
  $region8: #{res1d_forward.1} parent=0 // loop_exit
    _

</llo_original>
